<compile_context>
chip_gen: v7x
topology: tpu7x:2x2x1
jax: 0.10.0
libtpu: 0.0.40
codegen_flags: <defaults>
</compile_context>

<pallas_src>
import functools

import jax
import jax.numpy as jnp
import numpy as np
from jax import lax
from jax.experimental import pallas as pl
from jax.experimental.pallas import tpu as pltpu


def _round_up(x, m):
    return ((x + m - 1) // m) * m


def _vmem_capacity_bytes():
    """Physical VMEM per core; conservative (v7x-sized) fallback if unknown."""
    try:
        return int(pltpu.get_tpu_info().vmem_capacity_bytes)
    except Exception:
        return 64 << 20


def _stats_kernel(x_ref, stats_ref, c_scr, s1_acc, s2_acc, *,
                  hw, thw, eps, need_mask):
    """Per-row (N*C) spatial mean / unbiased std, reduced over the HW grid axis.

    Shifted accumulation: c = per-row first element (captured at h == 0),
      S1 = sum(x - c), S2 = sum((x - c)^2)  over *valid* elements only, so
      mean = c + S1/HW,   var = (S2 - S1^2/HW) / (HW - 1).
    Accumulators are per-lane (TR, 128) partials (VPU adds only per step); the
    cross-lane XLU reduce happens once per row tile in the finalize block.
    """
    h = pl.program_id(1)
    x = x_ref[...].astype(jnp.float32)
    tr = x.shape[0]
    n_chunks = thw // 128

    @pl.when(h == 0)
    def _():
        # Per-row shift, replicated across lanes once so each per-chunk
        # subtraction below is a plain elementwise VPU op.
        c_scr[...] = jnp.broadcast_to(x[:, 0:1], (tr, 128))
        s1_acc[...] = jnp.zeros_like(s1_acc)
        s2_acc[...] = jnp.zeros_like(s2_acc)

    c = c_scr[...]
    if need_mask:
        lane = lax.broadcasted_iota(jnp.int32, (tr, 128), 1)

    p1 = jnp.zeros((tr, 128), jnp.float32)
    p2 = jnp.zeros((tr, 128), jnp.float32)
    for k in range(n_chunks):
        d = x[:, k * 128:(k + 1) * 128] - c
        if need_mask:
            # Valid iff global column (h*thw + k*128 + lane) < HW.  Edge-block
            # contents beyond the array extent are undefined; zero them out.
            d = jnp.where(lane < (hw - h * thw - k * 128), d, 0.0)
        p1 = p1 + d
        p2 = p2 + d * d
    s1_acc[...] += p1
    s2_acc[...] += p2

    @pl.when(h == pl.num_programs(1) - 1)
    def _():
        s1 = jnp.sum(s1_acc[...], axis=-1, keepdims=True)
        s2 = jnp.sum(s2_acc[...], axis=-1, keepdims=True)
        c0 = c_scr[:, 0:1]
        inv_hw = 1.0 / float(hw)
        mean = c0 + s1 * inv_hw
        # Unbiased (ddof=1) variance like torch.var.  The max(hw-1, 1) guard
        # avoids a trace-time ZeroDivisionError when HW == 1 (torch -> NaN).
        var = (s2 - s1 * s1 * inv_hw) / float(max(hw - 1, 1))
        var = jnp.maximum(var, 0.0)  # clamp tiny negative rounding residue
        std = jnp.sqrt(var + eps)
        # Packed (mean, std) output: one tiny (TR, 2) write-back per row tile.
        stats_ref[:, 0:1] = mean
        stats_ref[:, 1:2] = std


def _affine_kernel(x_ref, aff_ref, y_ref):
    """y = x * scale + shift with per-row (scale, shift) packed as aff[:, 0:2]."""
    x = x_ref[...].astype(jnp.float32)
    scale = aff_ref[:, 0:1]
    shift = aff_ref[:, 1:2]
    y_ref[...] = (x * scale + shift).astype(y_ref.dtype)


def distribution_uncertainty(x, noise_mu, noise_std, *, eps=1e-6, factor=1.0,
                             training=True, apply_perturbation=True):
    """DSU forward.  x: (N, C, H, W); noise_mu / noise_std: (N, C) N(0,1) draws."""
    if (not training) or (not apply_perturbation):
        # Mirrors: `if not self.training or np.random.random() > self.p: return x`
        return x

    N, C, H, W = x.shape
    HW = H * W
    R = N * C
    x2 = x.reshape(R, HW)              # contiguous flatten: no copy

    # ---- Tile selection (no padding, no divisibility requirement) -----------
    vmem_cap = _vmem_capacity_bytes()
    if vmem_cap >= (96 << 20):         # v5e / v6e: 128 MiB physical VMEM
        row_cap, vmem_limit, split_rows = 512, 48 << 20, False
    else:                              # v7x: 64 MiB physical VMEM per TC
        row_cap, vmem_limit, split_rows = 256, 32 << 20, True

    THW = min(_round_up(HW, 128), 4096)          # lane-dense, <= 16 KiB / row
    TR = min(_round_up(R, 8), row_cap)
    # v7x megacore: give the parallel row axis >= 2 steps when possible so
    # both TensorCores get work in the stats pass (hw axis is a reduction).
    if split_rows and pl.cdiv(R, TR) < 2 and R > 8:
        TR = _round_up(pl.cdiv(R, 2), 8)

    grid = (pl.cdiv(R, TR), pl.cdiv(HW, THW))
    need_mask = (HW % THW) != 0

    # ---- Pass 1: per-row spatial mean/std, packed as (R, 2) -----------------
    stats = pl.pallas_call(
        functools.partial(_stats_kernel, hw=HW, thw=THW, eps=eps,
                          need_mask=need_mask),
        out_shape=jax.ShapeDtypeStruct((R, 2), jnp.float32),
        grid_spec=pltpu.PrefetchScalarGridSpec(
            num_scalar_prefetch=0,
            grid=grid,
            in_specs=[pl.BlockSpec((TR, THW), lambda r, h: (r, h))],
            out_specs=pl.BlockSpec((TR, 2), lambda r, h: (r, 0)),
            scratch_shapes=[pltpu.VMEM((TR, 128), jnp.float32)] * 3),
        compiler_params=pltpu.CompilerParams(
            dimension_semantics=("parallel", "arbitrary"),
            vmem_limit_bytes=vmem_limit),
    )(x2)

    # ---- Middle step: tiny (N, C) batch statistics + reparameterization -----
    mean = stats[:, 0].reshape(N, C)
    std = stats[:, 1].reshape(N, C)
    sqrtvar_mu = jnp.sqrt(mean.var(axis=0, ddof=1, keepdims=True) + eps)
    sqrtvar_std = jnp.sqrt(std.var(axis=0, ddof=1, keepdims=True) + eps)
    beta = mean + noise_mu.astype(jnp.float32) * factor * sqrtvar_mu
    gamma = std + noise_std.astype(jnp.float32) * factor * sqrtvar_std
    # Fold ((x - mean)/std)*gamma + beta into a single affine y = x*scale+shift.
    scale = gamma / std
    shift = beta - mean * scale
    aff = jnp.stack([scale.reshape(R), shift.reshape(R)], axis=-1)   # (R, 2)

    # ---- Pass 2: tiled elementwise affine (HBM-bandwidth bound) -------------
    y2 = pl.pallas_call(
        _affine_kernel,
        out_shape=jax.ShapeDtypeStruct((R, HW), x.dtype),
        grid_spec=pltpu.PrefetchScalarGridSpec(
            num_scalar_prefetch=0,
            grid=grid,
            in_specs=[pl.BlockSpec((TR, THW), lambda r, h: (r, h)),
                      pl.BlockSpec((TR, 2), lambda r, h: (r, 0))],
            out_specs=pl.BlockSpec((TR, THW), lambda r, h: (r, h))),
        compiler_params=pltpu.CompilerParams(
            dimension_semantics=("parallel", "parallel"),
            vmem_limit_bytes=vmem_limit),
    )(x2, aff)

    return y2.reshape(N, C, H, W)


def _reference(x, noise_mu, noise_std, eps=1e-6, factor=1.0):
    # Pure-JAX reference matching the PyTorch forward (unbiased variance).
    xf = x.astype(jnp.float32)
    mean = xf.mean(axis=(2, 3))
    var = xf.var(axis=(2, 3), ddof=1)
    std = jnp.sqrt(var + eps)
    sqrtvar_mu = jnp.sqrt(mean.var(axis=0, ddof=1, keepdims=True) + eps)
    sqrtvar_std = jnp.sqrt(std.var(axis=0, ddof=1, keepdims=True) + eps)
    beta = mean + noise_mu * factor * sqrtvar_mu
    gamma = std + noise_std * factor * sqrtvar_std
    y = (xf - mean[:, :, None, None]) / std[:, :, None, None]
    y = y * gamma[:, :, None, None] + beta[:, :, None, None]
    return y.astype(x.dtype)


if __name__ == "__main__":
    key = jax.random.PRNGKey(0)

    def run_case(case_id, shape):
        N, C, H, W = shape
        kx, kmu, kstd = jax.random.split(jax.random.fold_in(key, case_id), 3)
        x = jax.random.normal(kx, shape, dtype=jnp.float32) * 2.0 + 0.5
        noise_mu = jax.random.normal(kmu, (N, C), dtype=jnp.float32)
        noise_std = jax.random.normal(kstd, (N, C), dtype=jnp.float32)

        y = distribution_uncertainty(x, noise_mu, noise_std, eps=1e-6,
                                     factor=1.0, training=True,
                                     apply_perturbation=True)
        y = jax.block_until_ready(y)

        y_ref = _reference(x, noise_mu, noise_std)
        assert y.shape == x.shape and y.dtype == x.dtype
        np.testing.assert_allclose(np.asarray(y), np.asarray(y_ref),
                                   rtol=1e-5, atol=1e-5)

    # Aligned small shape (typical module use).
    run_case(0, (2, 4, 16, 16))
    # Non-(8,128)-aligned shape: exercises the cdiv grid, partial edge blocks
    # in both dims, and the in-kernel lane masking on the last HW tile.
    run_case(1, (2, 3, 65, 67))

    print("KERNEL_OK")
</pallas_src>

<mosaic_0001>
module attributes {stable_mosaic.version = 11 : i64} {
  func.func @_stats_kernel(%arg0: i32, %arg1: i32, %arg2: memref<8x256xf32, #tpu.memory_space<vmem>>, %arg3: memref<8x2xf32, #tpu.memory_space<vmem>>, %arg4: memref<8x128xf32, #tpu.memory_space<vmem>>, %arg5: memref<8x128xf32, #tpu.memory_space<vmem>>, %arg6: memref<8x128xf32, #tpu.memory_space<vmem>>) attributes {dimension_semantics = [#tpu.dimension_semantics<parallel>, #tpu.dimension_semantics<arbitrary>], iteration_bounds = array<i64: 1, 1>, scalar_prefetch = 0 : i64, scratch_operands = 3 : i64, tpu.core_type = #tpu.core_type<tc>, window_params = [{transform_indices = @transform_0, window_bounds = array<i64: 8, 256>}, {transform_indices = @transform_1, window_bounds = array<i64: 8, 2>}]} {
    %c0 = arith.constant 0 : index
    %c0_0 = arith.constant 0 : index
    %0 = vector.load %arg2[%c0, %c0_0] : memref<8x256xf32, #tpu.memory_space<vmem>>, vector<8x256xf32>
    %c0_i32 = arith.constant 0 : i32
    %1 = arith.cmpi eq, %arg1, %c0_i32 : i32
    %2 = arith.extui %1 : i1 to i32
    %c0_i32_1 = arith.constant 0 : i32
    %3 = arith.cmpi ne, %2, %c0_i32_1 : i32
    scf.if %3 {
      %26 = vector.extract_strided_slice %0 {offsets = [0, 0], sizes = [8, 1], strides = [1, 1]} : vector<8x256xf32> to vector<8x1xf32>
      %27 = vector.shape_cast %26 : vector<8x1xf32> to vector<8x1xf32>
      %28 = vector.broadcast %27 : vector<8x1xf32> to vector<8x128xf32>
      %c0_15 = arith.constant 0 : index
      %c0_16 = arith.constant 0 : index
      %29 = vector.load %arg4[%c0_15, %c0_16] : memref<8x128xf32, #tpu.memory_space<vmem>>, vector<8x128xf32>
      tpu.vector_store %arg4[%c0_15, %c0_16], %28 {strides = array<i32>} : memref<8x128xf32, #tpu.memory_space<vmem>>, vector<8x128xf32>,
      %cst_17 = arith.constant 0.000000e+00 : f32
      %30 = vector.broadcast %cst_17 : f32 to vector<8x128xf32>
      %c0_18 = arith.constant 0 : index
      %c0_19 = arith.constant 0 : index
      %31 = vector.load %arg5[%c0_18, %c0_19] : memref<8x128xf32, #tpu.memory_space<vmem>>, vector<8x128xf32>
      tpu.vector_store %arg5[%c0_18, %c0_19], %30 {strides = array<i32>} : memref<8x128xf32, #tpu.memory_space<vmem>>, vector<8x128xf32>,
      %cst_20 = arith.constant 0.000000e+00 : f32
      %32 = vector.broadcast %cst_20 : f32 to vector<8x128xf32>
      %c0_21 = arith.constant 0 : index
      %c0_22 = arith.constant 0 : index
      %33 = vector.load %arg6[%c0_21, %c0_22] : memref<8x128xf32, #tpu.memory_space<vmem>>, vector<8x128xf32>
      tpu.vector_store %arg6[%c0_21, %c0_22], %32 {strides = array<i32>} : memref<8x128xf32, #tpu.memory_space<vmem>>, vector<8x128xf32>,
    } else {
    }
    %c0_2 = arith.constant 0 : index
    %c0_3 = arith.constant 0 : index
    %4 = vector.load %arg4[%c0_2, %c0_3] : memref<8x128xf32, #tpu.memory_space<vmem>>, vector<8x128xf32>
    %cst = arith.constant 0.000000e+00 : f32
    %5 = vector.broadcast %cst : f32 to vector<8x128xf32>
    %cst_4 = arith.constant 0.000000e+00 : f32
    %6 = vector.broadcast %cst_4 : f32 to vector<8x128xf32>
    %7 = vector.extract_strided_slice %0 {offsets = [0, 0], sizes = [8, 128], strides = [1, 1]} : vector<8x256xf32> to vector<8x128xf32>
    %8 = arith.subf %7, %4 : vector<8x128xf32>
    %9 = arith.addf %5, %8 : vector<8x128xf32>
    %10 = arith.mulf %8, %8 : vector<8x128xf32>
    %11 = arith.addf %6, %10 : vector<8x128xf32>
    %12 = vector.extract_strided_slice %0 {offsets = [0, 128], sizes = [8, 128], strides = [1, 1]} : vector<8x256xf32> to vector<8x128xf32>
    %13 = arith.subf %12, %4 : vector<8x128xf32>
    %14 = arith.addf %9, %13 : vector<8x128xf32>
    %15 = arith.mulf %13, %13 : vector<8x128xf32>
    %16 = arith.addf %11, %15 : vector<8x128xf32>
    %c0_5 = arith.constant 0 : index
    %c0_6 = arith.constant 0 : index
    %17 = vector.load %arg5[%c0_5, %c0_6] : memref<8x128xf32, #tpu.memory_space<vmem>>, vector<8x128xf32>
    %18 = arith.addf %17, %14 : vector<8x128xf32>
    %c0_7 = arith.constant 0 : index
    %c0_8 = arith.constant 0 : index
    %19 = vector.load %arg5[%c0_7, %c0_8] : memref<8x128xf32, #tpu.memory_space<vmem>>, vector<8x128xf32>
    tpu.vector_store %arg5[%c0_7, %c0_8], %18 {strides = array<i32>} : memref<8x128xf32, #tpu.memory_space<vmem>>, vector<8x128xf32>,
    %c0_9 = arith.constant 0 : index
    %c0_10 = arith.constant 0 : index
    %20 = vector.load %arg6[%c0_9, %c0_10] : memref<8x128xf32, #tpu.memory_space<vmem>>, vector<8x128xf32>
    %21 = arith.addf %20, %16 : vector<8x128xf32>
    %c0_11 = arith.constant 0 : index
    %c0_12 = arith.constant 0 : index
    %22 = vector.load %arg6[%c0_11, %c0_12] : memref<8x128xf32, #tpu.memory_space<vmem>>, vector<8x128xf32>
    tpu.vector_store %arg6[%c0_11, %c0_12], %21 {strides = array<i32>} : memref<8x128xf32, #tpu.memory_space<vmem>>, vector<8x128xf32>,
    %c0_i32_13 = arith.constant 0 : i32
    %23 = arith.cmpi eq, %arg1, %c0_i32_13 : i32
    %24 = arith.extui %23 : i1 to i32
    %c0_i32_14 = arith.constant 0 : i32
    %25 = arith.cmpi ne, %24, %c0_i32_14 : i32
    scf.if %25 {
      %c0_15 = arith.constant 0 : index
      %c0_16 = arith.constant 0 : index
      %26 = vector.load %arg5[%c0_15, %c0_16] : memref<8x128xf32, #tpu.memory_space<vmem>>, vector<8x128xf32>
      %cst_17 = arith.constant dense<0.000000e+00> : vector<8xf32>
      %27 = vector.multi_reduction <add>, %26, %cst_17 [1] : vector<8x128xf32> to vector<8xf32>
      %28 = vector.shape_cast %27 : vector<8xf32> to vector<8x1xf32>
      %c0_18 = arith.constant 0 : index
      %c0_19 = arith.constant 0 : index
      %29 = vector.load %arg6[%c0_18, %c0_19] : memref<8x128xf32, #tpu.memory_space<vmem>>, vector<8x128xf32>
      %cst_20 = arith.constant dense<0.000000e+00> : vector<8xf32>
      %30 = vector.multi_reduction <add>, %29, %cst_20 [1] : vector<8x128xf32> to vector<8xf32>
      %31 = vector.shape_cast %30 : vector<8xf32> to vector<8x1xf32>
      %c0_21 = arith.constant 0 : index
      %c0_22 = arith.constant 0 : index
      %32 = vector.load %arg4[%c0_21, %c0_22] : memref<8x128xf32, #tpu.memory_space<vmem>>, vector<8x1xf32>
      %cst_23 = arith.constant 3.906250e-03 : f32
      %33 = vector.broadcast %cst_23 : f32 to vector<8x1xf32>
      %34 = arith.mulf %28, %33 : vector<8x1xf32>
      %35 = arith.addf %32, %34 : vector<8x1xf32>
      %36 = arith.mulf %28, %28 : vector<8x1xf32>
      %cst_24 = arith.constant 3.906250e-03 : f32
      %37 = vector.broadcast %cst_24 : f32 to vector<8x1xf32>
      %38 = arith.mulf %36, %37 : vector<8x1xf32>
      %39 = arith.subf %31, %38 : vector<8x1xf32>
      %cst_25 = arith.constant 2.550000e+02 : f32
      %40 = vector.broadcast %cst_25 : f32 to vector<8x1xf32>
      %41 = arith.divf %39, %40 : vector<8x1xf32>
      %cst_26 = arith.constant 0.000000e+00 : f32
      %42 = vector.broadcast %cst_26 : f32 to vector<8x1xf32>
      %43 = arith.maximumf %41, %42 : vector<8x1xf32>
      %cst_27 = arith.constant 9.99999997E-7 : f32
      %44 = vector.broadcast %cst_27 : f32 to vector<8x1xf32>
      %45 = arith.addf %43, %44 : vector<8x1xf32>
      %46 = math.sqrt %45 : vector<8x1xf32>
      %c0_28 = arith.constant 0 : index
      %c0_29 = arith.constant 0 : index
      %47 = vector.load %arg3[%c0_28, %c0_29] : memref<8x2xf32, #tpu.memory_space<vmem>>, vector<8x1xf32>
      tpu.vector_store %arg3[%c0_28, %c0_29], %35 {strides = array<i32>} : memref<8x2xf32, #tpu.memory_space<vmem>>, vector<8x1xf32>,
      %c0_30 = arith.constant 0 : index
      %c1 = arith.constant 1 : index
      %48 = vector.load %arg3[%c0_30, %c1] : memref<8x2xf32, #tpu.memory_space<vmem>>, vector<8x1xf32>
      tpu.vector_store %arg3[%c0_30, %c1], %46 {strides = array<i32>} : memref<8x2xf32, #tpu.memory_space<vmem>>, vector<8x1xf32>,
    } else {
    }
    return
  }
  func.func @transform_0(%arg0: i32, %arg1: i32) -> (i32, i32) {
    %c0_i32 = arith.constant 0 : i32
    return %arg0, %arg1 : i32, i32
  }
  func.func @transform_1(%arg0: i32, %arg1: i32) -> (i32, i32) {
    %c0_i32 = arith.constant 0 : i32
    %c0_i32_0 = arith.constant 0 : i32
    return %arg0, %c0_i32 : i32, i32
  }
}

</mosaic_0001>

<llo_original>
// kernel: tpu_custom_call.1
$region0: #{tpu_custom_call.1}
  #allocation0 [shape = 'u32[]', space=smem, size = 0x4, offset = 0x4, fixed_abs, tag = 'smem constant byte address 0x4 - core index']
  #allocation1 [shape = 'u32[144,128]{1,0:T(1,128)}', space=vmem, size = 0x12000, scoped, tag = 'internal scratch']
  #allocation2 [shape = 'f32[8,128]{1,0:T(8,128)}', space=vmem, size = 0x1000, scoped, tag = 'scratch operand']
  #allocation3 [shape = 'f32[8,128]{1,0:T(8,128)}', space=vmem, size = 0x1000, scoped, tag = 'scratch operand']
  #allocation4 [shape = 'f32[8,128]{1,0:T(8,128)}', space=vmem, size = 0x1000, scoped, tag = 'scratch operand']
  %s0 = inlined_call_operand.hbm [shape: f32[8,256], index: 0, kind: input, shape index: {}]
  %s1 = inlined_call_operand.vmem [shape: f32[8,2], index: 1, kind: output, shape index: {}]
  %s2 = sld [smem:[#allocation0]]
  $region26: #{tpu_custom_call.1} parent=0
    _
  %s4 = ssub.s32 1, %s2
  %s5 = scalar_select 0, %s4, %s2
  $region1: #{tpu_custom_call.1} parent=0
    #allocation5 [shape = 'u8[8192]{0}', space=vmem, size = 0x2000, scoped, tag = 'input window, operand 0, single buffered']
    #allocation6 [shape = 's32[1]{0}', space=sflag, size = 0x4, scoped, tag = 'scoped memory for tpu_custom_call.1']
    %6 = vsyncpa [#allocation6], 0
    // Predicated region
    $region2: #{tpu_custom_call.1} parent=1 // pred_check
      _
    $region3: #{tpu_custom_call.1} parent=1 // pred_check_branch
      %8 = sbr.rel (0) target = $region5
    $region4: #{tpu_custom_call.1} parent=1 // pred_region
      %s10 = ssub.s32 256, 256
      %11 = vsyncadd [#allocation6], %s10
      %s13 = sshll.u32 [#allocation5], 4
      %s14 = int_to_ptr.vmem [resolvable:$true] %s13
      %16 = dma.hbm_to_vmem [thread:$0]  %s0, 256, %s14, [#allocation6]
    $region5: #{tpu_custom_call.1} parent=1 // pred_fallthru
      _
    // Predicated region
    $region6: #{tpu_custom_call.1} parent=1 // pred_check
      _
    $region7: #{tpu_custom_call.1} parent=1 // pred_check_branch
      %18 = sbr.rel (0) target = $region9
    $region8: #{tpu_custom_call.1} parent=1 // pred_region
      %19 = dma.done [#allocation6], 256
    $region9: #{tpu_custom_call.1} parent=1 // pred_fallthru
      _
    %v20 = vld [vmem:[#allocation5] sm:$0xff]
    %v21 = vld [vmem:[#allocation5 + $0x8] sm:$0xff]
    %p22 = scmp.eq.s32.totalorder 0, 0
    // Predicated region
    $region10: #{tpu_custom_call.1} parent=1 // pred_check
      %p23 = pneg %p22
    $region11: #{tpu_custom_call.1} parent=1 // pred_check_branch
      %25 = sbr.rel (%p23) target = $region13
    $region12: #{tpu_custom_call.1} parent=1 // pred_region
      %27 = vset.pattern.permute.xlu0 0
      %28 = vperm.xlu0 %27, %v20
      %v29 = vpop.permute.xlu0 %28
      %31 = vst [vmem:[#allocation2] sm:$0xff] %v29
      %32 = vst [vmem:[#allocation3] sm:$0xff] 0.0
      %33 = vst [vmem:[#allocation4] sm:$0xff] 0.0
    $region13: #{tpu_custom_call.1} parent=1 // pred_fallthru
      _
    %v34 = vld [vmem:[#allocation2] sm:$0xff]
    %v35 = vsub.f32 %v20, %v34
    %v36 = vadd.f32 %v35, 0.0
    %v37 = vmul.f32 %v35, %v35
    %v38 = vadd.f32 %v37, 0.0
    %v39 = vsub.f32 %v21, %v34
    %v40 = vadd.f32 %v36, %v39
    %v41 = vmul.f32 %v39, %v39
    %v42 = vadd.f32 %v38, %v41
    %v43 = vld [vmem:[#allocation3] sm:$0xff]
    %v44 = vadd.f32 %v43, %v40
    %45 = vst [vmem:[#allocation3] sm:$0xff] %v44
    %v46 = vld [vmem:[#allocation4] sm:$0xff]
    %v47 = vadd.f32 %v46, %v42
    %48 = vst [vmem:[#allocation4] sm:$0xff] %v47
    // Predicated region
    $region14: #{tpu_custom_call.1} parent=1 // pred_check
      %p49 = pneg %p22
    $region15: #{tpu_custom_call.1} parent=1 // pred_check_branch
      %51 = sbr.rel (%p49) target = $region17
    $region16: #{tpu_custom_call.1} parent=1 // pred_region
      %v52 = vld [vmem:[#allocation3] sm:$0xff]
      %53 = vadd.xlane.f32.xlu0 %v52
      %v54 = vpop.xlane.xlu0 %53
      %v55 = vld [vmem:[#allocation4] sm:$0xff]
      %56 = vadd.xlane.f32.xlu0 %v55
      %v57 = vpop.xlane.xlu0 %56
      %v58 = vld [vmem:[#allocation2] sm:$0xff]
      %v59 = vmul.f32 %v54, 0.00390625
      %v60 = vadd.f32 %v58, %v59
      %v61 = vmul.f32 %v54, %v54
      %v62 = vmul.f32 %v61, 0.00390625
      %v63 = vsub.f32 %v57, %v62
      %v64 = vrcp.pop 255.0
      %v65 = vmul.f32 %v63, %v64
      %v66 = vmax.f32 %v65, 0.0
      %v67 = vadd.f32 %v66, 1e-06
      %v68 = vrsqrt.pop %v67
      %v69 = vmul.f32 %v67, %v68
      %vm70 = vcmp.eq.f32.partialorder %v67, inf
      %v71 = vsel %vm70, %v67, %v69
      %vm72 = vcmp.eq.f32.partialorder %v67, 0.0
      %v73 = vand.u32 %v67, 2147483648
      %v74 = vsel %vm72, %v73, %v71
      %vm75 = vcmask 7168
      %76 = vst.msk [vmem:[%s1] sm:$0xff] %vm75, %v60
      %vm77 = vcmask 15368
      %78 = vst.msk [vmem:[%s1] sm:$0xff] %vm77, %v74
    $region17: #{tpu_custom_call.1} parent=1 // pred_fallthru
      _
    // Predicated region
    $region18: #{tpu_custom_call.1} parent=1 // pred_check
      _
    $region19: #{tpu_custom_call.1} parent=1 // pred_check_branch
      %80 = sbr.rel (0) target = $region21
    $region20: #{tpu_custom_call.1} parent=1 // pred_region
      _
    $region21: #{tpu_custom_call.1} parent=1 // pred_fallthru
      _
    // Predicated region
    $region22: #{tpu_custom_call.1} parent=1 // pred_check
      _
    $region23: #{tpu_custom_call.1} parent=1 // pred_check_branch
      %82 = sbr.rel (0) target = $region25
    $region24: #{tpu_custom_call.1} parent=1 // pred_region
      _
    $region25: #{tpu_custom_call.1} parent=1 // pred_fallthru
      _
    %83 = vsyncpa [#allocation6], 1

</llo_original>
